<compile_context>
chip_gen: v5e
topology: v5e:2x2
jax: 0.10.0
libtpu: 0.0.40
codegen_flags: <defaults>
</compile_context>

<pallas_src>
import math

import numpy as np
import jax
import jax.numpy as jnp
from jax import lax
from jax.experimental import pallas as pl
from jax.experimental.pallas import tpu as pltpu


def _round_up(x, m):
    return ((x + m - 1) // m) * m


def _sgcn_kernel(nnz_ref, cols_ref, xt_ref, xs_ref, adj_ref,
                 wqs_ref, bqs_ref, wkv_ref, bkv_ref, out_ref,
                 q_s, skip_s, m_s, l_s, acc_s):
    mi = pl.program_id(0)
    ji = pl.program_id(1)
    h = out_ref.shape[-1]
    scale = jnp.float32(1.0 / math.sqrt(h))
    neg = jnp.float32(-1e30)

    # Per target-row tile: project q|skip once, init online-softmax stats.
    @pl.when(ji == 0)
    def _init():
        ft = jnp.dot(xt_ref[...], wqs_ref[...],
                     preferred_element_type=jnp.float32) + bqs_ref[...]
        q_s[...] = ft[:, :h]
        skip_s[...] = ft[:, h:]
        m_s[...] = jnp.full(m_s.shape, neg, jnp.float32)
        l_s[...] = jnp.zeros(l_s.shape, jnp.float32)
        acc_s[...] = jnp.zeros(acc_s.shape, jnp.float32)

    # Only visit source tiles that actually contain edges into this row tile.
    @pl.when(ji < nnz_ref[mi])
    def _accumulate():
        # Project only the k|v columns of the current source tile.
        fs = jnp.dot(xs_ref[...], wkv_ref[...],
                     preferred_element_type=jnp.float32) + bkv_ref[...]
        k = fs[:, :h]
        v = fs[:, h:]
        mask = adj_ref[...] != 0

        # scores[i, j] = <q_i, k_j> / sqrt(h); bf16 MXU operands, f32 accumulate.
        scores = lax.dot_general(
            q_s[...].astype(jnp.bfloat16), k.astype(jnp.bfloat16),
            dimension_numbers=(((1,), (1,)), ((), ())),
            preferred_element_type=jnp.float32) * scale

        s_m = jnp.where(mask, scores, neg)
        m_prev = m_s[...]
        m_new = jnp.maximum(m_prev, jnp.max(s_m, axis=-1, keepdims=True))
        alpha = jnp.exp(m_prev - m_new)
        # Explicitly mask exp output: robust even when every unmasked logit is
        # extremely negative (review-flagged divergence mode).
        # TODO(synk): exp in bf16 on v6e/v7x (bf16-capable EUP) once validated.
        e = jnp.where(mask, jnp.exp(s_m - m_new), jnp.float32(0.0))

        l_s[...] = alpha * l_s[...] + jnp.sum(e, axis=-1, keepdims=True)
        acc_s[...] = alpha * acc_s[...] + jnp.dot(
            e.astype(jnp.bfloat16), v.astype(jnp.bfloat16),
            preferred_element_type=jnp.float32)
        m_s[...] = m_new

    @pl.when(ji == pl.num_programs(1) - 1)
    def _finalize():
        d = l_s[...] + jnp.float32(1e-16)            # PyG softmax eps
        inv = pl.reciprocal(d, approx=True)          # EUP slot
        inv = inv * (jnp.float32(2.0) - d * inv)     # one NR step -> f32 accuracy
        out_ref[...] = (acc_s[...] * inv + skip_s[...]).astype(out_ref.dtype)


def sgcn_forward(node_features, edge_index, edge_type, params,
                 *, tile_m=1024, tile_j=1024):
    """Pallas SGCN forward. edge_type is accepted but (like the module) unused."""
    del edge_type
    n, g = node_features.shape
    h2 = params["wq"].shape[1]

    # Device-aware VMEM budget (v7x: 64 MiB physical; v5e/v6e: 128 MiB).
    try:
        vmem_cap = int(getattr(pltpu.get_tpu_info(), "vmem_capacity_bytes",
                               128 * 1024 * 1024))
    except Exception:  # trace-time query unavailable -> conservative default
        vmem_cap = 128 * 1024 * 1024

    # Small-N fast path + decoupled row/col padding (no lcm blow-up).
    tile_m = max(8, min(tile_m, _round_up(n, 8)))
    if n >= 32 and _round_up(n, tile_m) // tile_m < 2:
        tile_m = _round_up((n + 1) // 2, 8)   # >=2 row tiles -> both v7x TCs busy
    tile_j = max(128, min(tile_j, _round_up(n, 128)))

    rows_pad = _round_up(n, tile_m)
    cols_pad = _round_up(n, tile_j)
    n_row_tiles = rows_pad // tile_m
    n_col_tiles = cols_pad // tile_j

    # Fused weights: [Wq|Ws] used on target rows, [Wk|Wv] used on source rows.
    w_qs = jnp.concatenate([params["wq"], params["ws"]], axis=1)
    b_qs = jnp.concatenate([params["bq"], params["bs"]], axis=1)
    w_kv = jnp.concatenate([params["wk"], params["wv"]], axis=1)
    b_kv = jnp.concatenate([params["bk"], params["bv"]], axis=1)

    x = node_features.astype(jnp.float32)
    x_t = jnp.zeros((rows_pad, g), jnp.float32).at[:n].set(x)
    x_s = jnp.zeros((cols_pad, g), jnp.float32).at[:n].set(x)

    # Dense int8 adjacency mask adj[i, j] = 1 iff edge j -> i (duplicate-free
    # edge_index assumed, as does the dense-softmax formulation).
    src, dst = edge_index[0], edge_index[1]
    adj = jnp.zeros((rows_pad, cols_pad), jnp.int8).at[dst, src].set(1)

    # Host-side block-sparsity structure: which source tiles hold edges into
    # each target-row tile. Scalar-prefetched; drives data-dependent index maps.
    src_np = np.asarray(src)
    dst_np = np.asarray(dst)
    blk = np.zeros((n_row_tiles, n_col_tiles), dtype=bool)
    if src_np.size:
        blk[dst_np // tile_m, src_np // tile_j] = True
    nnz_np = blk.sum(axis=1).astype(np.int32)
    max_nnz = max(int(nnz_np.max()) if nnz_np.size else 0, 1)
    cols_np = np.zeros((n_row_tiles, max_nnz), dtype=np.int32)
    for r in range(n_row_tiles):
        idx = np.flatnonzero(blk[r]).astype(np.int32)
        cols_np[r, :idx.size] = idx                  # pad with block 0 (guarded)
    nnz = jnp.asarray(nnz_np)
    cols_flat = jnp.asarray(cols_np.reshape(-1))     # 1D -> cheap SMEM padding

    grid = (n_row_tiles, max_nnz)

    # Cost estimate counts only the visited (nonzero) blocks.
    total_blocks = int(nnz_np.sum())
    flops = int(total_blocks * (4 * tile_m * tile_j * h2      # scores + attn@v
                                + 4 * tile_j * g * h2)        # k|v projection
                + n_row_tiles * 4 * tile_m * g * h2)          # q|skip projection
    transcendentals = int(total_blocks * tile_m * tile_j + rows_pad)
    bytes_accessed = int(total_blocks * (tile_m * tile_j + tile_j * g * 4)
                         + rows_pad * (g + h2) * 4
                         + 4 * (g + 1) * 2 * h2 * 4)

    # Scoped-VMEM budget: dominant consumers are the compiler-materialized
    # (tile_m, tile_j) f32 score/mask/exp slabs, not the BlockSpec buffers.
    vmem_est = (4 * tile_m * tile_j * 4            # f32 temporaries
                + 2 * tile_m * tile_j              # int8 adj double-buffer
                + 2 * (tile_m + tile_j) * g * 4    # x tiles (double-buffered)
                + tile_m * (3 * h2 + 2) * 4        # scratch
                + 4 * (g + 1) * 2 * h2 * 4)        # resident weights/bias
    vmem_limit = int(min(max(2 * vmem_est, 32 * 1024 * 1024),
                         vmem_cap * 3 // 4))

    idx_t = lambda mi, ji, nnz_r, cols_r: (mi, 0)
    idx_s = lambda mi, ji, nnz_r, cols_r: (cols_r[mi * max_nnz + ji], 0)
    idx_a = lambda mi, ji, nnz_r, cols_r: (mi, cols_r[mi * max_nnz + ji])
    idx_w = lambda mi, ji, nnz_r, cols_r: (0, 0)

    grid_spec = pltpu.PrefetchScalarGridSpec(
        num_scalar_prefetch=2,
        grid=grid,
        in_specs=[
            pl.BlockSpec((tile_m, g), idx_t),          # target rows
            pl.BlockSpec((tile_j, g), idx_s),          # source rows (sparse visit)
            pl.BlockSpec((tile_m, tile_j), idx_a),     # adjacency tile (int8)
            pl.BlockSpec((g, 2 * h2), idx_w),          # Wq|Ws resident
            pl.BlockSpec((1, 2 * h2), idx_w),          # bq|bs resident
            pl.BlockSpec((g, 2 * h2), idx_w),          # Wk|Wv resident
            pl.BlockSpec((1, 2 * h2), idx_w),          # bk|bv resident
        ],
        out_specs=pl.BlockSpec((tile_m, h2), idx_t),
        scratch_shapes=[
            pltpu.VMEM((tile_m, h2), jnp.float32),     # q (target tile)
            pltpu.VMEM((tile_m, h2), jnp.float32),     # skip (target tile)
            pltpu.VMEM((tile_m, 1), jnp.float32),      # running max
            pltpu.VMEM((tile_m, 1), jnp.float32),      # running denominator
            pltpu.VMEM((tile_m, h2), jnp.float32),     # output accumulator
        ],
    )

    out = pl.pallas_call(
        _sgcn_kernel,
        out_shape=jax.ShapeDtypeStruct((rows_pad, h2), jnp.float32),
        grid_spec=grid_spec,
        compiler_params=pltpu.CompilerParams(
            dimension_semantics=("parallel", "arbitrary"),
            vmem_limit_bytes=vmem_limit),
        cost_estimate=pl.CostEstimate(
            flops=flops, transcendentals=transcendentals,
            bytes_accessed=bytes_accessed),
    )(nnz, cols_flat, x_t, x_s, adj, w_qs, b_qs, w_kv, b_kv)
    return out[:n]


def _reference(node_features, edge_index, params):
    """Pure-JAX reference of TransformerConv(heads=1) for a correctness check."""
    x = node_features.astype(jnp.float32)
    q = x @ params["wq"] + params["bq"]
    k = x @ params["wk"] + params["bk"]
    v = x @ params["wv"] + params["bv"]
    skip = x @ params["ws"] + params["bs"]
    c = q.shape[-1]
    src, dst = edge_index[0], edge_index[1]
    alpha = jnp.sum(q[dst] * k[src], axis=-1) / math.sqrt(c)
    n = x.shape[0]
    amax = jnp.full((n,), -jnp.inf).at[dst].max(alpha)
    e = jnp.exp(alpha - amax[dst])
    denom = jnp.zeros((n,)).at[dst].add(e) + 1e-16
    w = e / denom[dst]
    out = jnp.zeros_like(skip).at[dst].add(w[:, None] * v[src])
    return out + skip


if __name__ == "__main__":
    # Module config (synthetic, deterministic). h1_dim is unused by SGCN.forward.
    g_dim, h1_dim, h2_dim = 16, 8, 32
    n_nodes = 12

    key = jax.random.PRNGKey(0)
    ks = jax.random.split(key, 9)

    def lin_w(k, fan_in, fan_out):
        bound = 1.0 / math.sqrt(fan_in)
        return jax.random.uniform(k, (fan_in, fan_out), jnp.float32, -bound, bound)

    def lin_b(k, fan_in, fan_out):
        bound = 1.0 / math.sqrt(fan_in)
        return jax.random.uniform(k, (1, fan_out), jnp.float32, -bound, bound)

    params = {
        "wq": lin_w(ks[0], g_dim, h2_dim), "bq": lin_b(ks[1], g_dim, h2_dim),
        "wk": lin_w(ks[2], g_dim, h2_dim), "bk": lin_b(ks[3], g_dim, h2_dim),
        "wv": lin_w(ks[4], g_dim, h2_dim), "bv": lin_b(ks[5], g_dim, h2_dim),
        "ws": lin_w(ks[6], g_dim, h2_dim), "bs": lin_b(ks[7], g_dim, h2_dim),
    }

    node_features = jax.random.normal(ks[8], (n_nodes, g_dim), jnp.float32)

    # Duplicate-free directed edges: ring + skip-2 ring (each node has 2 in-edges).
    src = jnp.concatenate([jnp.arange(n_nodes), jnp.arange(n_nodes)])
    dst = jnp.concatenate([(jnp.arange(n_nodes) + 1) % n_nodes,
                           (jnp.arange(n_nodes) + 2) % n_nodes])
    edge_index = jnp.stack([src, dst]).astype(jnp.int32)        # [2, E]
    edge_type = jnp.zeros((edge_index.shape[1],), jnp.int32)    # unused by forward

    out = sgcn_forward(node_features, edge_index, edge_type, params)
    out = jax.block_until_ready(out)

    ref = _reference(node_features, edge_index, params)
    assert out.shape == (n_nodes, h2_dim)
    # bf16 MXU operands with f32 accumulation -> bf16-appropriate tolerance.
    assert jnp.allclose(out, ref, atol=1e-2, rtol=1e-2), "mismatch vs reference"

    print("KERNEL_OK")
</pallas_src>

<mosaic_0001>
module attributes {stable_mosaic.version = 11 : i64} {
  func.func @_sgcn_kernel(%arg0: i32, %arg1: i32, %arg2: memref<1xi32, #tpu.memory_space<smem>>, %arg3: memref<1xi32, #tpu.memory_space<smem>>, %arg4: memref<16x16xf32, #tpu.memory_space<vmem>>, %arg5: memref<128x16xf32, #tpu.memory_space<vmem>>, %arg6: memref<16x128xi8, #tpu.memory_space<vmem>>, %arg7: memref<16x64xf32, #tpu.memory_space<vmem>>, %arg8: memref<1x64xf32, #tpu.memory_space<vmem>>, %arg9: memref<16x64xf32, #tpu.memory_space<vmem>>, %arg10: memref<1x64xf32, #tpu.memory_space<vmem>>, %arg11: memref<16x32xf32, #tpu.memory_space<vmem>>, %arg12: memref<16x32xf32, #tpu.memory_space<vmem>>, %arg13: memref<16x32xf32, #tpu.memory_space<vmem>>, %arg14: memref<16x1xf32, #tpu.memory_space<vmem>>, %arg15: memref<16x1xf32, #tpu.memory_space<vmem>>, %arg16: memref<16x32xf32, #tpu.memory_space<vmem>>) attributes {dimension_semantics = [#tpu.dimension_semantics<parallel>, #tpu.dimension_semantics<arbitrary>], iteration_bounds = array<i64: 1, 1>, scalar_prefetch = 2 : i64, scratch_operands = 5 : i64, tpu.core_type = #tpu.core_type<tc>, window_params = [{transform_indices = @transform_0, window_bounds = array<i64: 16, 16>}, {transform_indices = @transform_1, window_bounds = array<i64: 128, 16>}, {transform_indices = @transform_2, window_bounds = array<i64: 16, 128>}, {pipeline_mode = #tpu.pipeline_mode<synchronous>, transform_indices = @transform_3, window_bounds = array<i64: 16, 64>}, {pipeline_mode = #tpu.pipeline_mode<synchronous>, transform_indices = @transform_4, window_bounds = array<i64: 1, 64>}, {pipeline_mode = #tpu.pipeline_mode<synchronous>, transform_indices = @transform_5, window_bounds = array<i64: 16, 64>}, {pipeline_mode = #tpu.pipeline_mode<synchronous>, transform_indices = @transform_6, window_bounds = array<i64: 1, 64>}, {transform_indices = @transform_7, window_bounds = array<i64: 16, 32>}]} {
    %c0_i32 = arith.constant 0 : i32
    %0 = arith.cmpi eq, %arg1, %c0_i32 : i32
    %1 = arith.extui %0 : i1 to i32
    %cst = arith.constant -1.000000e+30 : f32
    %c0_i32_0 = arith.constant 0 : i32
    %2 = arith.cmpi ne, %1, %c0_i32_0 : i32
    scf.if %2 {
      %c0 = arith.constant 0 : index
      %c0_6 = arith.constant 0 : index
      %11 = vector.load %arg4[%c0, %c0_6] : memref<16x16xf32, #tpu.memory_space<vmem>>, vector<16x16xf32>
      %c0_7 = arith.constant 0 : index
      %c0_8 = arith.constant 0 : index
      %12 = vector.load %arg7[%c0_7, %c0_8] : memref<16x64xf32, #tpu.memory_space<vmem>>, vector<16x64xf32>
      %cst_9 = arith.constant dense<0.000000e+00> : vector<16x64xf32>
      %13 = tpu.matmul %11, %12, %cst_9 {dimension_numbers = #tpu.dot_dimension_numbers<[1], [0], [0], [1], [0, 0, 1, 1], [], []>} : vector<16x16xf32>, vector<16x64xf32>, vector<16x64xf32> -> vector<16x64xf32>
      %c0_10 = arith.constant 0 : index
      %c0_11 = arith.constant 0 : index
      %14 = vector.load %arg8[%c0_10, %c0_11] : memref<1x64xf32, #tpu.memory_space<vmem>>, vector<1x64xf32>
      %15 = vector.broadcast %14 : vector<1x64xf32> to vector<16x64xf32>
      %16 = arith.addf %13, %15 : vector<16x64xf32>
      %17 = vector.extract_strided_slice %16 {offsets = [0, 0], sizes = [16, 32], strides = [1, 1]} : vector<16x64xf32> to vector<16x32xf32>
      %c0_12 = arith.constant 0 : index
      %c0_13 = arith.constant 0 : index
      %18 = vector.load %arg12[%c0_12, %c0_13] : memref<16x32xf32, #tpu.memory_space<vmem>>, vector<16x32xf32>
      tpu.vector_store %arg12[%c0_12, %c0_13], %17 {strides = array<i32>} : memref<16x32xf32, #tpu.memory_space<vmem>>, vector<16x32xf32>,
      %19 = vector.extract_strided_slice %16 {offsets = [0, 32], sizes = [16, 32], strides = [1, 1]} : vector<16x64xf32> to vector<16x32xf32>
      %c0_14 = arith.constant 0 : index
      %c0_15 = arith.constant 0 : index
      %20 = vector.load %arg13[%c0_14, %c0_15] : memref<16x32xf32, #tpu.memory_space<vmem>>, vector<16x32xf32>
      tpu.vector_store %arg13[%c0_14, %c0_15], %19 {strides = array<i32>} : memref<16x32xf32, #tpu.memory_space<vmem>>, vector<16x32xf32>,
      %21 = vector.broadcast %cst : f32 to vector<16x1xf32>
      %c0_16 = arith.constant 0 : index
      %c0_17 = arith.constant 0 : index
      %22 = vector.load %arg14[%c0_16, %c0_17] : memref<16x1xf32, #tpu.memory_space<vmem>>, vector<16x1xf32>
      tpu.vector_store %arg14[%c0_16, %c0_17], %21 {strides = array<i32>} : memref<16x1xf32, #tpu.memory_space<vmem>>, vector<16x1xf32>,
      %cst_18 = arith.constant 0.000000e+00 : f32
      %23 = vector.broadcast %cst_18 : f32 to vector<16x1xf32>
      %c0_19 = arith.constant 0 : index
      %c0_20 = arith.constant 0 : index
      %24 = vector.load %arg15[%c0_19, %c0_20] : memref<16x1xf32, #tpu.memory_space<vmem>>, vector<16x1xf32>
      tpu.vector_store %arg15[%c0_19, %c0_20], %23 {strides = array<i32>} : memref<16x1xf32, #tpu.memory_space<vmem>>, vector<16x1xf32>,
      %cst_21 = arith.constant 0.000000e+00 : f32
      %25 = vector.broadcast %cst_21 : f32 to vector<16x32xf32>
      %c0_22 = arith.constant 0 : index
      %c0_23 = arith.constant 0 : index
      %26 = vector.load %arg16[%c0_22, %c0_23] : memref<16x32xf32, #tpu.memory_space<vmem>>, vector<16x32xf32>
      tpu.vector_store %arg16[%c0_22, %c0_23], %25 {strides = array<i32>} : memref<16x32xf32, #tpu.memory_space<vmem>>, vector<16x32xf32>,
    } else {
    }
    %3 = arith.index_cast %arg0 : i32 to index
    %4 = memref.load %arg2[%3] : memref<1xi32, #tpu.memory_space<smem>>
    %5 = arith.cmpi slt, %arg1, %4 : i32
    %6 = arith.extui %5 : i1 to i32
    %cst_1 = arith.constant 0.176776692 : f32
    %cst_2 = arith.constant -1.000000e+30 : f32
    %c0_i32_3 = arith.constant 0 : i32
    %7 = arith.cmpi ne, %6, %c0_i32_3 : i32
    scf.if %7 {
      %c0 = arith.constant 0 : index
      %c0_6 = arith.constant 0 : index
      %11 = vector.load %arg5[%c0, %c0_6] : memref<128x16xf32, #tpu.memory_space<vmem>>, vector<128x16xf32>
      %c0_7 = arith.constant 0 : index
      %c0_8 = arith.constant 0 : index
      %12 = vector.load %arg9[%c0_7, %c0_8] : memref<16x64xf32, #tpu.memory_space<vmem>>, vector<16x64xf32>
      %cst_9 = arith.constant dense<0.000000e+00> : vector<128x64xf32>
      %13 = tpu.matmul %11, %12, %cst_9 {dimension_numbers = #tpu.dot_dimension_numbers<[1], [0], [0], [1], [0, 0, 1, 1], [], []>} : vector<128x16xf32>, vector<16x64xf32>, vector<128x64xf32> -> vector<128x64xf32>
      %c0_10 = arith.constant 0 : index
      %c0_11 = arith.constant 0 : index
      %14 = vector.load %arg10[%c0_10, %c0_11] : memref<1x64xf32, #tpu.memory_space<vmem>>, vector<1x64xf32>
      %15 = vector.broadcast %14 : vector<1x64xf32> to vector<128x64xf32>
      %16 = arith.addf %13, %15 : vector<128x64xf32>
      %17 = vector.extract_strided_slice %16 {offsets = [0, 0], sizes = [128, 32], strides = [1, 1]} : vector<128x64xf32> to vector<128x32xf32>
      %18 = vector.extract_strided_slice %16 {offsets = [0, 32], sizes = [128, 32], strides = [1, 1]} : vector<128x64xf32> to vector<128x32xf32>
      %c0_12 = arith.constant 0 : index
      %c0_13 = arith.constant 0 : index
      %19 = vector.load %arg6[%c0_12, %c0_13] : memref<16x128xi8, #tpu.memory_space<vmem>>, vector<16x128xi8>
      %c0_i8 = arith.constant 0 : i8
      %20 = vector.broadcast %c0_i8 : i8 to vector<16x128xi8>
      %21 = arith.cmpi ne, %19, %20 : vector<16x128xi8>
      %c0_14 = arith.constant 0 : index
      %c0_15 = arith.constant 0 : index
      %22 = vector.load %arg12[%c0_14, %c0_15] : memref<16x32xf32, #tpu.memory_space<vmem>>, vector<16x32xf32>
      %23 = arith.truncf %22 : vector<16x32xf32> to vector<16x32xbf16>
      %24 = arith.truncf %17 : vector<128x32xf32> to vector<128x32xbf16>
      %cst_16 = arith.constant dense<0.000000e+00> : vector<16x128xf32>
      %25 = tpu.matmul %23, %24, %cst_16 {dimension_numbers = #tpu.dot_dimension_numbers<[1], [1], [0], [0], [0, 0, 1, 0], [], []>} : vector<16x32xbf16>, vector<128x32xbf16>, vector<16x128xf32> -> vector<16x128xf32>
      %26 = vector.broadcast %cst_1 : f32 to vector<16x128xf32>
      %27 = arith.mulf %25, %26 : vector<16x128xf32>
      %28 = vector.broadcast %cst_2 : f32 to vector<16x128xf32>
      %29 = arith.select %21, %27, %28 : vector<16x128xi1>, vector<16x128xf32>
      %c0_17 = arith.constant 0 : index
      %c0_18 = arith.constant 0 : index
      %30 = vector.load %arg14[%c0_17, %c0_18] : memref<16x1xf32, #tpu.memory_space<vmem>>, vector<16x1xf32>
      %cst_19 = arith.constant dense<0xFF800000> : vector<16xf32>
      %31 = vector.multi_reduction <maximumf>, %29, %cst_19 [1] : vector<16x128xf32> to vector<16xf32>
      %32 = vector.shape_cast %31 : vector<16xf32> to vector<16x1xf32>
      %33 = arith.maximumf %30, %32 : vector<16x1xf32>
      %34 = arith.subf %30, %33 : vector<16x1xf32>
      %35 = math.exp %34 : vector<16x1xf32>
      %36 = vector.broadcast %33 : vector<16x1xf32> to vector<16x128xf32>
      %37 = arith.subf %29, %36 : vector<16x128xf32>
      %38 = math.exp %37 : vector<16x128xf32>
      %cst_20 = arith.constant 0.000000e+00 : f32
      %39 = vector.broadcast %cst_20 : f32 to vector<16x128xf32>
      %40 = arith.select %21, %38, %39 : vector<16x128xi1>, vector<16x128xf32>
      %c0_21 = arith.constant 0 : index
      %c0_22 = arith.constant 0 : index
      %41 = vector.load %arg15[%c0_21, %c0_22] : memref<16x1xf32, #tpu.memory_space<vmem>>, vector<16x1xf32>
      %42 = arith.mulf %35, %41 : vector<16x1xf32>
      %cst_23 = arith.constant dense<0.000000e+00> : vector<16xf32>
      %43 = vector.multi_reduction <add>, %40, %cst_23 [1] : vector<16x128xf32> to vector<16xf32>
      %44 = vector.shape_cast %43 : vector<16xf32> to vector<16x1xf32>
      %45 = arith.addf %42, %44 : vector<16x1xf32>
      %c0_24 = arith.constant 0 : index
      %c0_25 = arith.constant 0 : index
      %46 = vector.load %arg15[%c0_24, %c0_25] : memref<16x1xf32, #tpu.memory_space<vmem>>, vector<16x1xf32>
      tpu.vector_store %arg15[%c0_24, %c0_25], %45 {strides = array<i32>} : memref<16x1xf32, #tpu.memory_space<vmem>>, vector<16x1xf32>,
      %c0_26 = arith.constant 0 : index
      %c0_27 = arith.constant 0 : index
      %47 = vector.load %arg16[%c0_26, %c0_27] : memref<16x32xf32, #tpu.memory_space<vmem>>, vector<16x32xf32>
      %48 = vector.broadcast %35 : vector<16x1xf32> to vector<16x32xf32>
      %49 = arith.mulf %48, %47 : vector<16x32xf32>
      %50 = arith.truncf %40 : vector<16x128xf32> to vector<16x128xbf16>
      %51 = arith.truncf %18 : vector<128x32xf32> to vector<128x32xbf16>
      %cst_28 = arith.constant dense<0.000000e+00> : vector<16x32xf32>
      %52 = tpu.matmul %50, %51, %cst_28 {dimension_numbers = #tpu.dot_dimension_numbers<[1], [0], [0], [1], [0, 0, 1, 1], [], []>} : vector<16x128xbf16>, vector<128x32xbf16>, vector<16x32xf32> -> vector<16x32xf32>
      %53 = arith.addf %49, %52 : vector<16x32xf32>
      %c0_29 = arith.constant 0 : index
      %c0_30 = arith.constant 0 : index
      %54 = vector.load %arg16[%c0_29, %c0_30] : memref<16x32xf32, #tpu.memory_space<vmem>>, vector<16x32xf32>
      tpu.vector_store %arg16[%c0_29, %c0_30], %53 {strides = array<i32>} : memref<16x32xf32, #tpu.memory_space<vmem>>, vector<16x32xf32>,
      %c0_31 = arith.constant 0 : index
      %c0_32 = arith.constant 0 : index
      %55 = vector.load %arg14[%c0_31, %c0_32] : memref<16x1xf32, #tpu.memory_space<vmem>>, vector<16x1xf32>
      tpu.vector_store %arg14[%c0_31, %c0_32], %33 {strides = array<i32>} : memref<16x1xf32, #tpu.memory_space<vmem>>, vector<16x1xf32>,
    } else {
    }
    %c0_i32_4 = arith.constant 0 : i32
    %8 = arith.cmpi eq, %arg1, %c0_i32_4 : i32
    %9 = arith.extui %8 : i1 to i32
    %c0_i32_5 = arith.constant 0 : i32
    %10 = arith.cmpi ne, %9, %c0_i32_5 : i32
    scf.if %10 {
      %c0 = arith.constant 0 : index
      %c0_6 = arith.constant 0 : index
      %11 = vector.load %arg15[%c0, %c0_6] : memref<16x1xf32, #tpu.memory_space<vmem>>, vector<16x1xf32>
      %cst_7 = arith.constant 1.000000e-16 : f32
      %12 = vector.broadcast %cst_7 : f32 to vector<16x1xf32>
      %13 = arith.addf %11, %12 : vector<16x1xf32>
      %14 = tpu.reciprocal %13 {approx = true} : vector<16x1xf32> -> vector<16x1xf32>
      %15 = arith.mulf %13, %14 : vector<16x1xf32>
      %cst_8 = arith.constant 2.000000e+00 : f32
      %16 = vector.broadcast %cst_8 : f32 to vector<16x1xf32>
      %17 = arith.subf %16, %15 : vector<16x1xf32>
      %18 = arith.mulf %14, %17 : vector<16x1xf32>
      %c0_9 = arith.constant 0 : index
      %c0_10 = arith.constant 0 : index
      %19 = vector.load %arg16[%c0_9, %c0_10] : memref<16x32xf32, #tpu.memory_space<vmem>>, vector<16x32xf32>
      %20 = vector.broadcast %18 : vector<16x1xf32> to vector<16x32xf32>
      %21 = arith.mulf %19, %20 : vector<16x32xf32>
      %c0_11 = arith.constant 0 : index
      %c0_12 = arith.constant 0 : index
      %22 = vector.load %arg13[%c0_11, %c0_12] : memref<16x32xf32, #tpu.memory_space<vmem>>, vector<16x32xf32>
      %23 = arith.addf %21, %22 : vector<16x32xf32>
      %c0_13 = arith.constant 0 : index
      %c0_14 = arith.constant 0 : index
      %24 = vector.load %arg11[%c0_13, %c0_14] : memref<16x32xf32, #tpu.memory_space<vmem>>, vector<16x32xf32>
      tpu.vector_store %arg11[%c0_13, %c0_14], %23 {strides = array<i32>} : memref<16x32xf32, #tpu.memory_space<vmem>>, vector<16x32xf32>,
    } else {
    }
    return
  }
  func.func @transform_0(%arg0: i32, %arg1: i32, %arg2: memref<1xi32, #tpu.memory_space<smem>>, %arg3: memref<1xi32, #tpu.memory_space<smem>>) -> (i32, i32) {
    %c0_i32 = arith.constant 0 : i32
    %c0_i32_0 = arith.constant 0 : i32
    return %arg0, %c0_i32 : i32, i32
  }
  func.func @transform_1(%arg0: i32, %arg1: i32, %arg2: memref<1xi32, #tpu.memory_space<smem>>, %arg3: memref<1xi32, #tpu.memory_space<smem>>) -> (i32, i32) {
    %c1_i32 = arith.constant 1 : i32
    %0 = arith.muli %arg0, %c1_i32 : i32
    %1 = arith.addi %0, %arg1 : i32
    %2 = arith.index_cast %1 : i32 to index
    %3 = memref.load %arg3[%2] : memref<1xi32, #tpu.memory_space<smem>>
    %c0_i32 = arith.constant 0 : i32
    %c0_i32_0 = arith.constant 0 : i32
    return %3, %c0_i32 : i32, i32
  }
  func.func @transform_2(%arg0: i32, %arg1: i32, %arg2: memref<1xi32, #tpu.memory_space<smem>>, %arg3: memref<1xi32, #tpu.memory_space<smem>>) -> (i32, i32) {
    %c1_i32 = arith.constant 1 : i32
    %0 = arith.muli %arg0, %c1_i32 : i32
    %1 = arith.addi %0, %arg1 : i32
    %2 = arith.index_cast %1 : i32 to index
    %3 = memref.load %arg3[%2] : memref<1xi32, #tpu.memory_space<smem>>
    %c0_i32 = arith.constant 0 : i32
    return %arg0, %3 : i32, i32
  }
  func.func @transform_3(%arg0: i32, %arg1: i32, %arg2: memref<1xi32, #tpu.memory_space<smem>>, %arg3: memref<1xi32, #tpu.memory_space<smem>>) -> (i32, i32) {
    %c0_i32 = arith.constant 0 : i32
    %c0_i32_0 = arith.constant 0 : i32
    %c0_i32_1 = arith.constant 0 : i32
    return %c0_i32, %c0_i32_0 : i32, i32
  }
  func.func @transform_4(%arg0: i32, %arg1: i32, %arg2: memref<1xi32, #tpu.memory_space<smem>>, %arg3: memref<1xi32, #tpu.memory_space<smem>>) -> (i32, i32) {
    %c0_i32 = arith.constant 0 : i32
    %c0_i32_0 = arith.constant 0 : i32
    %c0_i32_1 = arith.constant 0 : i32
    return %c0_i32, %c0_i32_0 : i32, i32
  }
  func.func @transform_5(%arg0: i32, %arg1: i32, %arg2: memref<1xi32, #tpu.memory_space<smem>>, %arg3: memref<1xi32, #tpu.memory_space<smem>>) -> (i32, i32) {
    %c0_i32 = arith.constant 0 : i32
    %c0_i32_0 = arith.constant 0 : i32
    %c0_i32_1 = arith.constant 0 : i32
    return %c0_i32, %c0_i32_0 : i32, i32
  }
  func.func @transform_6(%arg0: i32, %arg1: i32, %arg2: memref<1xi32, #tpu.memory_space<smem>>, %arg3: memref<1xi32, #tpu.memory_space<smem>>) -> (i32, i32) {
    %c0_i32 = arith.constant 0 : i32
    %c0_i32_0 = arith.constant 0 : i32
    %c0_i32_1 = arith.constant 0 : i32
    return %c0_i32, %c0_i32_0 : i32, i32
  }
  func.func @transform_7(%arg0: i32, %arg1: i32, %arg2: memref<1xi32, #tpu.memory_space<smem>>, %arg3: memref<1xi32, #tpu.memory_space<smem>>) -> (i32, i32) {
    %c0_i32 = arith.constant 0 : i32
    %c0_i32_0 = arith.constant 0 : i32
    return %arg0, %c0_i32 : i32, i32
  }
}

</mosaic_0001>

<llo_original>
// kernel: tpu_custom_call.1
$region0: #{tpu_custom_call.1}
  #allocation0 [shape = 'u32[]', space=smem, size = 0x4, offset = 0x4, fixed_abs, tag = 'smem constant byte address 0x4 - core index']
  #allocation1 [shape = 'u32[72,128]{1,0:T(1,128)}', space=vmem, size = 0x9000, scoped, tag = 'internal scratch']
  #allocation2 [shape = 'f32[16,32]{1,0:T(8,128)}', space=vmem, size = 0x2000, scoped, tag = 'scratch operand']
  #allocation3 [shape = 'f32[16,32]{1,0:T(8,128)}', space=vmem, size = 0x2000, scoped, tag = 'scratch operand']
  #allocation4 [shape = 'f32[16,1]{1,0:T(8,128)}', space=vmem, size = 0x2000, scoped, tag = 'scratch operand']
  #allocation5 [shape = 'f32[16,1]{1,0:T(8,128)}', space=vmem, size = 0x2000, scoped, tag = 'scratch operand']
  #allocation6 [shape = 'f32[16,32]{1,0:T(8,128)}', space=vmem, size = 0x2000, scoped, tag = 'scratch operand']
  #allocation7 [shape = 's32[1]{0}', space=sflag, size = 0x4, scoped, tag = 'scoped memory for tpu_custom_call.1']
  #allocation8 [shape = 's32[1]{0:T(128)S(6)}', space=smem, size = 0x200, scoped, tag = 'prefetched SMEM operand 0']
  #allocation9 [shape = 's32[1]{0:T(128)S(6)}', space=smem, size = 0x200, scoped, tag = 'prefetched SMEM operand 1']
  %s0 = inlined_call_operand.<no memory space> [shape: s32[1], index: 0, kind: input, shape index: {}]
  %s1 = inlined_call_operand.<no memory space> [shape: s32[1], index: 1, kind: input, shape index: {}]
  %s2 = inlined_call_operand.vmem [shape: f32[16,16], index: 2, kind: input, shape index: {}]
  %s3 = inlined_call_operand.vmem [shape: f32[128,16], index: 3, kind: input, shape index: {}]
  %s4 = inlined_call_operand.vmem [shape: s8[16,128], index: 4, kind: input, shape index: {}]
  %s5 = inlined_call_operand.vmem [shape: f32[16,64], index: 5, kind: input, shape index: {}]
  %s6 = inlined_call_operand.vmem [shape: f32[1,64], index: 6, kind: input, shape index: {}]
  %s7 = inlined_call_operand.vmem [shape: f32[16,64], index: 7, kind: input, shape index: {}]
  %s8 = inlined_call_operand.vmem [shape: f32[1,64], index: 8, kind: input, shape index: {}]
  %s9 = inlined_call_operand.hbm [shape: f32[16,32], index: 9, kind: output, shape index: {}]
  %s10 = sld [smem:[#allocation0]]
  $region50: #{tpu_custom_call.1} parent=0
    _
  %s12 = ssub.s32 1, %s10
  %s13 = scalar_select 0, %s12, %s10
  %14 = sst [smem:[#allocation8]] %s0
  %15 = sst [smem:[#allocation9]] %s1
  $region1: #{tpu_custom_call.1} parent=0
    #allocation10 [shape = 'u8[8192]{0}', space=vmem, size = 0x2000, scoped, tag = 'output window, operand 0, single buffered']
    #allocation11 [shape = 's32[1]{0}', space=sflag, size = 0x4, scoped, tag = 'scoped memory for tpu_custom_call.1']
    %16 = vsyncpa [#allocation11], 0
    // Predicated region
    $region2: #{tpu_custom_call.1} parent=1 // pred_check
      _
    $region3: #{tpu_custom_call.1} parent=1 // pred_check_branch
      %18 = sbr.rel (0) target = $region5
    $region4: #{tpu_custom_call.1} parent=1 // pred_region
      _
    $region5: #{tpu_custom_call.1} parent=1 // pred_fallthru
      _
    // Predicated region
    $region6: #{tpu_custom_call.1} parent=1 // pred_check
      _
    $region7: #{tpu_custom_call.1} parent=1 // pred_check_branch
      %20 = sbr.rel (0) target = $region9
    $region8: #{tpu_custom_call.1} parent=1 // pred_region
      %s21 = sadd.s32 0, 0
      %s22 = sld [smem:[#allocation9 + %s21]]
      %s23 = smul.u32 16, %s22
      %p24 = scmp.lt.s32.totalorder %s23, 15
      %s25 = scalar_select %p24, %s23, 15
      %s26 = smul.addr %s25, 8
      %s27 = scalar_lea.vmem %s3, %s26
      %s28 = sadd.s32 0, 0
      %s29 = sld [smem:[#allocation9 + %s28]]
      %s30 = smul.u32 16, %s29
    $region9: #{tpu_custom_call.1} parent=1 // pred_fallthru
      _
    // Predicated region
    $region10: #{tpu_custom_call.1} parent=1 // pred_check
      _
    $region11: #{tpu_custom_call.1} parent=1 // pred_check_branch
      %32 = sbr.rel (0) target = $region13
    $region12: #{tpu_custom_call.1} parent=1 // pred_region
      %s33 = sadd.s32 0, 0
      %s34 = sld [smem:[#allocation9 + %s33]]
      %p35 = scmp.lt.s32.totalorder %s34, 0
      %s36 = scalar_select %p35, %s34, 0
      %s37 = smul.addr %s36, 2
      %s38 = scalar_lea.vmem %s4, %s37
      %s39 = sadd.s32 0, 0
      %s40 = sld [smem:[#allocation9 + %s39]]
    $region13: #{tpu_custom_call.1} parent=1 // pred_fallthru
      _
    // Predicated region
    $region14: #{tpu_custom_call.1} parent=1 // pred_check
      _
    $region15: #{tpu_custom_call.1} parent=1 // pred_check_branch
      %42 = sbr.rel (0) target = $region17
    $region16: #{tpu_custom_call.1} parent=1 // pred_region
      _
    $region17: #{tpu_custom_call.1} parent=1 // pred_fallthru
      _
    // Predicated region
    $region18: #{tpu_custom_call.1} parent=1 // pred_check
      _
    $region19: #{tpu_custom_call.1} parent=1 // pred_check_branch
      %44 = sbr.rel (0) target = $region21
    $region20: #{tpu_custom_call.1} parent=1 // pred_region
      _
    $region21: #{tpu_custom_call.1} parent=1 // pred_fallthru
      _
    // Predicated region
    $region22: #{tpu_custom_call.1} parent=1 // pred_check
      _
    $region23: #{tpu_custom_call.1} parent=1 // pred_check_branch
      %46 = sbr.rel (0) target = $region25
    $region24: #{tpu_custom_call.1} parent=1 // pred_region
      _
    $region25: #{tpu_custom_call.1} parent=1 // pred_fallthru
      _
    // Predicated region
    $region26: #{tpu_custom_call.1} parent=1 // pred_check
      _
    $region27: #{tpu_custom_call.1} parent=1 // pred_check_branch
      %48 = sbr.rel (0) target = $region29
    $region28: #{tpu_custom_call.1} parent=1 // pred_region
      _
    $region29: #{tpu_custom_call.1} parent=1 // pred_fallthru
      _
    %s49 = sadd.s32 0, 0
    %s50 = sld [smem:[#allocation9 + %s49]]
    %s51 = smul.u32 16, %s50
    %p52 = scmp.lt.s32.totalorder %s51, 15
    %s53 = scalar_select %p52, %s51, 15
    %s54 = smul.addr %s53, 8
    %s55 = scalar_lea.vmem %s3, %s54
    %s56 = sadd.s32 0, 0
    %s57 = sld [smem:[#allocation9 + %s56]]
    %p58 = scmp.lt.s32.totalorder %s57, 0
    %s59 = scalar_select %p58, %s57, 0
    %s60 = smul.addr %s59, 2
    %s61 = scalar_lea.vmem %s4, %s60
    %s62 = sadd.s32 0, 0
    %s63 = sld [smem:[#allocation9 + %s62]]
    %s64 = smul.u32 16, %s63
    %p65 = scmp.lt.s32.totalorder %s64, 15
    %s66 = scalar_select %p65, %s64, 15
    %s67 = smul.addr %s66, 8
    %s68 = scalar_lea.vmem %s3, %s67
    %s69 = sadd.s32 0, 0
    %s70 = sld [smem:[#allocation9 + %s69]]
    %s71 = smul.u32 16, %s70
    %s72 = sadd.s32 0, 0
    %s73 = sld [smem:[#allocation9 + %s72]]
    %p74 = scmp.lt.s32.totalorder %s73, 0
    %s75 = scalar_select %p74, %s73, 0
    %s76 = smul.addr %s75, 2
    %s77 = scalar_lea.vmem %s4, %s76
    %s78 = sadd.s32 0, 0
    %s79 = sld [smem:[#allocation9 + %s78]]
    %p82 = scmp.eq.s32.totalorder 0, 0
    // Predicated region
    $region30: #{tpu_custom_call.1} parent=1 // pred_check
      %p83 = pneg %p82
    $region31: #{tpu_custom_call.1} parent=1 // pred_check_branch
      %85 = sbr.rel (%p83) target = $region33
    $region32: #{tpu_custom_call.1} parent=1 // pred_region
      %v86 = vld [vmem:[%s2] sm:$0xff]
      %v87 = vld [vmem:[%s2 + $0x8] sm:$0xff]
      %v88 = vld [vmem:[%s5] sm:$0xff]
      %v89 = vld [vmem:[%s5 + $0x8] sm:$0xff]
      %v90 = vld [vmem:[%s6] sm:$0x1]
      %v92 = vperm.slane %v90, 0
      %vm94 = vcmask 130048
      %v96 = vsel %vm94, %v86, 0
      %v99 = vsel %vm94, %v87, 0
      %101 = vmatpush.msra.mxu0 0.0
      %102 = vmatpush.msra.mxu0 0.0
      %103 = vmatpush.msra.mxu0 0.0
      %104 = vmatpush.msra.mxu0 0.0
      %105 = vmatpush.msra.mxu0 0.0
      %106 = vmatpush.msra.mxu0 0.0
      %107 = vmatpush.msra.mxu0 0.0
      %108 = vmatpush.msra.mxu0 0.0
      %109 = vmatpush.msra.mxu0 0.0
      %110 = vmatpush.msra.mxu0 0.0
      %111 = vmatpush.msra.mxu0 0.0
      %112 = vmatpush.msra.mxu0 0.0
      %113 = vmatpush.msra.mxu0 0.0
      %114 = vmatpush.msra.mxu0 0.0
      %115 = vmatpush.msra.mxu0 %v89
      %116 = vmatpush.msra.mxu0 %v88
      %117 = vmatmul.f32.gmra.mxu0 %v96
      %v118 = vpop.f32.mrf.mxu0
      %v119 = vadd.f32 %v92, %v118
      %120 = vmatmul.f32.gmra.mxu0 %v99
      %v121 = vpop.f32.mrf.mxu0
      %v122 = vadd.f32 %v92, %v121
      %123 = vdwg.mxu0
      %vm124 = vcmask 261120
      %125 = vst.msk [vmem:[#allocation2] sm:$0xff] %vm124, %v119
      %126 = vst.msk [vmem:[#allocation2 + $0x8] sm:$0xff] %vm124, %v122
      %129 = vrot.lane.b32.xlu0 %v119, 96
      %v130 = vpop.permute.xlu0 %129
      %131 = vrot.lane.b32.xlu0 %v122, 96
      %v132 = vpop.permute.xlu0 %131
      %135 = vst.msk [vmem:[#allocation3] sm:$0xff] %vm124, %v130
      %136 = vst.msk [vmem:[#allocation3 + $0x8] sm:$0xff] %vm124, %v132
      %vm137 = vcmask 7168
      %138 = vst.msk [vmem:[#allocation4] sm:$0xff] %vm137, -1e+30
      %139 = vst.msk [vmem:[#allocation4 + $0x8] sm:$0xff] %vm137, -1e+30
      %140 = vst.msk [vmem:[#allocation5] sm:$0xff] %vm137, 0.0
      %141 = vst.msk [vmem:[#allocation5 + $0x8] sm:$0xff] %vm137, 0.0
      %142 = vst.msk [vmem:[#allocation6] sm:$0xff] %vm124, 0.0
      %143 = vst.msk [vmem:[#allocation6 + $0x8] sm:$0xff] %vm124, 0.0
    $region33: #{tpu_custom_call.1} parent=1 // pred_fallthru
      _
    %s144 = sld [smem:[#allocation8]]
    %p145 = scmp.lt.s32.totalorder 0, %s144
    // Predicated region
    $region34: #{tpu_custom_call.1} parent=1 // pred_check
      %p146 = pneg %p145
    $region35: #{tpu_custom_call.1} parent=1 // pred_check_branch
      %148 = sbr.rel (%p146) target = $region37
    $region36: #{tpu_custom_call.1} parent=1 // pred_region
      %v149 = vld [vmem:[%s68] sm:$0xff]
      %v150 = vld [vmem:[%s68 + $0x8] sm:$0xff]
      %v151 = vld [vmem:[%s68 + $0x10] sm:$0xff]
      %v152 = vld [vmem:[%s68 + $0x18] sm:$0xff]
      %v153 = vld [vmem:[%s68 + $0x20] sm:$0xff]
      %v154 = vld [vmem:[%s68 + $0x28] sm:$0xff]
      %v155 = vld [vmem:[%s68 + $0x30] sm:$0xff]
      %v156 = vld [vmem:[%s68 + $0x38] sm:$0xff]
      %v157 = vld [vmem:[%s68 + $0x40] sm:$0xff]
      %v158 = vld [vmem:[%s68 + $0x48] sm:$0xff]
      %v159 = vld [vmem:[%s68 + $0x50] sm:$0xff]
      %v160 = vld [vmem:[%s68 + $0x58] sm:$0xff]
      %v161 = vld [vmem:[%s68 + $0x60] sm:$0xff]
      %v162 = vld [vmem:[%s68 + $0x68] sm:$0xff]
      %v163 = vld [vmem:[%s68 + $0x70] sm:$0xff]
      %v164 = vld [vmem:[%s68 + $0x78] sm:$0xff]
      %v165 = vld [vmem:[%s7] sm:$0xff]
      %v166 = vld [vmem:[%s7 + $0x8] sm:$0xff]
      %v167 = vld [vmem:[%s8] sm:$0x1]
      %v169 = vperm.slane %v167, 0
      %vm171 = vcmask 130048
      %v173 = vsel %vm171, %v149, 0
      %v176 = vsel %vm171, %v150, 0
      %v179 = vsel %vm171, %v151, 0
      %v182 = vsel %vm171, %v152, 0
      %v185 = vsel %vm171, %v153, 0
      %v188 = vsel %vm171, %v154, 0
      %v191 = vsel %vm171, %v155, 0
      %v194 = vsel %vm171, %v156, 0
      %v197 = vsel %vm171, %v157, 0
      %v200 = vsel %vm171, %v158, 0
      %v203 = vsel %vm171, %v159, 0
      %v206 = vsel %vm171, %v160, 0
      %v209 = vsel %vm171, %v161, 0
      %v212 = vsel %vm171, %v162, 0
      %v215 = vsel %vm171, %v163, 0
      %v218 = vsel %vm171, %v164, 0
      %220 = vmatpush.msra.mxu0 0.0
      %221 = vmatpush.msra.mxu0 0.0
      %222 = vmatpush.msra.mxu0 0.0
      %223 = vmatpush.msra.mxu0 0.0
      %224 = vmatpush.msra.mxu0 0.0
      %225 = vmatpush.msra.mxu0 0.0
      %226 = vmatpush.msra.mxu0 0.0
      %227 = vmatpush.msra.mxu0 0.0
      %228 = vmatpush.msra.mxu0 0.0
      %229 = vmatpush.msra.mxu0 0.0
      %230 = vmatpush.msra.mxu0 0.0
      %231 = vmatpush.msra.mxu0 0.0
      %232 = vmatpush.msra.mxu0 0.0
      %233 = vmatpush.msra.mxu0 0.0
      %234 = vmatpush.msra.mxu0 %v166
      %235 = vmatpush.msra.mxu0 %v165
      %236 = vmatmul.f32.gmra.mxu0 %v173
      %v237 = vpop.f32.mrf.mxu0
      %v238 = vadd.f32 %v169, %v237
      %239 = vmatmul.f32.gmra.mxu0 %v176
      %v240 = vpop.f32.mrf.mxu0
      %v241 = vadd.f32 %v169, %v240
      %242 = vmatmul.f32.gmra.mxu0 %v179
      %v243 = vpop.f32.mrf.mxu0
      %v244 = vadd.f32 %v169, %v243
      %245 = vmatmul.f32.gmra.mxu0 %v182
      %v246 = vpop.f32.mrf.mxu0
      %v247 = vadd.f32 %v169, %v246
      %248 = vmatmul.f32.gmra.mxu0 %v185
      %v249 = vpop.f32.mrf.mxu0
      %v250 = vadd.f32 %v169, %v249
      %251 = vmatmul.f32.gmra.mxu0 %v188
      %v252 = vpop.f32.mrf.mxu0
      %v253 = vadd.f32 %v169, %v252
      %254 = vmatmul.f32.gmra.mxu0 %v191
      %v255 = vpop.f32.mrf.mxu0
      %v256 = vadd.f32 %v169, %v255
      %257 = vmatmul.f32.gmra.mxu0 %v194
      %v258 = vpop.f32.mrf.mxu0
      %v259 = vadd.f32 %v169, %v258
      %260 = vmatmul.f32.gmra.mxu0 %v197
      %v261 = vpop.f32.mrf.mxu0
      %v262 = vadd.f32 %v169, %v261
      %263 = vmatmul.f32.gmra.mxu0 %v200
      %v264 = vpop.f32.mrf.mxu0
      %v265 = vadd.f32 %v169, %v264
      %266 = vmatmul.f32.gmra.mxu0 %v203
      %v267 = vpop.f32.mrf.mxu0
      %v268 = vadd.f32 %v169, %v267
      %269 = vmatmul.f32.gmra.mxu0 %v206
      %v270 = vpop.f32.mrf.mxu0
      %v271 = vadd.f32 %v169, %v270
      %272 = vmatmul.f32.gmra.mxu0 %v209
      %v273 = vpop.f32.mrf.mxu0
      %v274 = vadd.f32 %v169, %v273
      %275 = vmatmul.f32.gmra.mxu0 %v212
      %v276 = vpop.f32.mrf.mxu0
      %v277 = vadd.f32 %v169, %v276
      %278 = vmatmul.f32.gmra.mxu0 %v215
      %v279 = vpop.f32.mrf.mxu0
      %v280 = vadd.f32 %v169, %v279
      %281 = vmatmul.f32.gmra.mxu0 %v218
      %v282 = vpop.f32.mrf.mxu0
      %v283 = vadd.f32 %v169, %v282
      %284 = vdwg.mxu0
      %v285 = vld [vmem:[%s77] sm:$0x3]
      %v286 = vld [vmem:[%s77 + $0x2] sm:$0x3]
      %vm287 = vnez %v285
      %vm288 = vnez %v286
      %v289 = vld [vmem:[#allocation2] sm:$0xff]
      %v290 = vld [vmem:[#allocation2 + $0x8] sm:$0xff]
      %v291 = vpack.c.bf16 %v290, %v289
      %v292 = vpack.c.bf16 %v241, %v238
      %v293 = vpack.c.bf16 %v247, %v244
      %v294 = vpack.c.bf16 %v253, %v250
      %v295 = vpack.c.bf16 %v259, %v256
      %v296 = vpack.c.bf16 %v265, %v262
      %v297 = vpack.c.bf16 %v271, %v268
      %v298 = vpack.c.bf16 %v277, %v274
      %v299 = vpack.c.bf16 %v283, %v280
      %vm300 = vcmask 261120
      %v302 = vsel %vm300, %v291, 0
      %v305 = vsel %vm300, %v292, 0
      %v308 = vsel %vm300, %v293, 0
      %v311 = vsel %vm300, %v294, 0
      %v314 = vsel %vm300, %v295, 0
      %v317 = vsel %vm300, %v296, 0
      %v320 = vsel %vm300, %v297, 0
      %v323 = vsel %vm300, %v298, 0
      %v326 = vsel %vm300, %v299, 0
      %328 = vmatpush.bf16.xpose.msra.mxu0 %v326
      %329 = vmatpush.bf16.xpose.msra.mxu0 %v323
      %330 = vmatpush.bf16.xpose.msra.mxu0 %v320
      %331 = vmatpush.bf16.xpose.msra.mxu0 %v317
      %332 = vmatpush.bf16.xpose.msra.mxu0 %v314
      %333 = vmatpush.bf16.xpose.msra.mxu0 %v311
      %334 = vmatpush.bf16.xpose.msra.mxu0 %v308
      %335 = vmatpush.bf16.xpose.msra.mxu0 %v305
      %336 = vmatmul.bf16.gmra.mxu0 %v302
      %v337 = vpop.f32.mrf.mxu0
      %v338 = vadd.f32 0.0, %v337
      %v339 = vpop.f32.mrf.mxu0
      %v340 = vadd.f32 0.0, %v339
      %341 = vdwg.mxu0
      %v342 = vmul.f32 %v338, 0.17677669
      %v343 = vmul.f32 %v340, 0.17677669
      %v344 = vsel %vm287, 16843009, 0
      %v345 = vsel %vm288, 16843009, 0
      %v346 = vunpack.c.0.s8 %v344
      %v347 = vunpack.c.0.s8 %v345
      %vm348 = vcmp.ne.s32.totalorder %v346, 0
      %vm349 = vcmp.ne.s32.totalorder %v347, 0
      %v350 = vsel %vm348, %v342, -1e+30
      %v351 = vsel %vm349, %v343, -1e+30
      %v352 = vld [vmem:[#allocation4] sm:$0xff]
      %v353 = vld [vmem:[#allocation4 + $0x8] sm:$0xff]
      %354 = vmax.xlane.f32.xlu0 %v350
      %v355 = vpop.xlane.xlu0 %354
      %356 = vmax.xlane.f32.xlu0 %v351
      %v357 = vpop.xlane.xlu0 %356
      %v358 = vmax.f32 %v352, %v355
      %v359 = vmax.f32 %v353, %v357
      %v360 = vsub.f32 %v352, %v358
      %v361 = vsub.f32 %v353, %v359
      %v362 = vmul.f32 %v360, 1.442695
      %v363 = vpow.pop %v362
      %v364 = vmul.f32 %v361, 1.442695
      %v365 = vpow.pop %v364
      %367 = vset.pattern.permute.xlu0 0
      %368 = vperm.xlu0 %367, %v358
      %v369 = vpop.permute.xlu0 %368
      %372 = vset.pattern.permute.xlu0 0
      %373 = vperm.xlu0 %372, %v359
      %v374 = vpop.permute.xlu0 %373
      %v376 = vsub.f32 %v350, %v369
      %v377 = vsub.f32 %v351, %v374
      %v378 = vmul.f32 %v376, 1.442695
      %v379 = vpow.pop %v378
      %v380 = vmul.f32 %v377, 1.442695
      %v381 = vpow.pop %v380
      %v382 = vsel %vm348, %v379, 0.0
      %v383 = vsel %vm349, %v381, 0.0
      %v384 = vld [vmem:[#allocation5] sm:$0xff]
      %v385 = vld [vmem:[#allocation5 + $0x8] sm:$0xff]
      %v386 = vmul.f32 %v363, %v384
      %v387 = vmul.f32 %v365, %v385
      %388 = vadd.xlane.f32.xlu0 %v382
      %v389 = vpop.xlane.xlu0 %388
      %390 = vadd.xlane.f32.xlu0 %v383
      %v391 = vpop.xlane.xlu0 %390
      %v392 = vadd.f32 %v386, %v389
      %v393 = vadd.f32 %v387, %v391
      %vm394 = vcmask 7168
      %395 = vst.msk [vmem:[#allocation5] sm:$0xff] %vm394, %v392
      %396 = vst.msk [vmem:[#allocation5 + $0x8] sm:$0xff] %vm394, %v393
      %v397 = vld [vmem:[#allocation6] sm:$0xff]
      %v398 = vld [vmem:[#allocation6 + $0x8] sm:$0xff]
      %400 = vset.pattern.permute.xlu0 0
      %401 = vperm.xlu0 %400, %v363
      %v402 = vpop.permute.xlu0 %401
      %405 = vset.pattern.permute.xlu0 0
      %406 = vperm.xlu0 %405, %v365
      %v407 = vpop.permute.xlu0 %406
      %v409 = vmul.f32 %v402, %v397
      %v410 = vmul.f32 %v407, %v398
      %v411 = vpack.c.bf16 %v383, %v382
      %420 = vrot.lane.b32.xlu0 %v292, 96
      %v421 = vpop.permute.xlu0 %420
      %422 = vrot.lane.b32.xlu0 %v293, 96
      %v423 = vpop.permute.xlu0 %422
      %424 = vrot.lane.b32.xlu0 %v294, 96
      %v425 = vpop.permute.xlu0 %424
      %426 = vrot.lane.b32.xlu0 %v295, 96
      %v427 = vpop.permute.xlu0 %426
      %428 = vrot.lane.b32.xlu0 %v296, 96
      %v429 = vpop.permute.xlu0 %428
      %430 = vrot.lane.b32.xlu0 %v297, 96
      %v431 = vpop.permute.xlu0 %430
      %432 = vrot.lane.b32.xlu0 %v298, 96
      %v433 = vpop.permute.xlu0 %432
      %434 = vrot.lane.b32.xlu0 %v299, 96
      %v435 = vpop.permute.xlu0 %434
      %444 = vmatpush.bf16.msra.mxu0 %v435
      %445 = vmatpush.bf16.msra.mxu0 %v433
      %446 = vmatpush.bf16.msra.mxu0 %v431
      %447 = vmatpush.bf16.msra.mxu0 %v429
      %448 = vmatpush.bf16.msra.mxu0 %v427
      %449 = vmatpush.bf16.msra.mxu0 %v425
      %450 = vmatpush.bf16.msra.mxu0 %v423
      %451 = vmatpush.bf16.msra.mxu0 %v421
      %452 = vmatmul.bf16.gmra.mxu0 %v411
      %v453 = vpop.f32.mrf.mxu0
      %v454 = vadd.f32 0.0, %v453
      %v455 = vpop.f32.mrf.mxu0
      %v456 = vadd.f32 0.0, %v455
      %457 = vdwg.mxu0
      %v458 = vadd.f32 %v409, %v454
      %v459 = vadd.f32 %v410, %v456
      %460 = vst.msk [vmem:[#allocation6] sm:$0xff] %vm300, %v458
      %461 = vst.msk [vmem:[#allocation6 + $0x8] sm:$0xff] %vm300, %v459
      %462 = vst.msk [vmem:[#allocation4] sm:$0xff] %vm394, %v358
      %463 = vst.msk [vmem:[#allocation4 + $0x8] sm:$0xff] %vm394, %v359
    $region37: #{tpu_custom_call.1} parent=1 // pred_fallthru
      _
    // Predicated region
    $region38: #{tpu_custom_call.1} parent=1 // pred_check
      %p464 = pneg %p82
    $region39: #{tpu_custom_call.1} parent=1 // pred_check_branch
      %466 = sbr.rel (%p464) target = $region41
    $region40: #{tpu_custom_call.1} parent=1 // pred_region
      %v467 = vld [vmem:[#allocation5] sm:$0xff]
      %v468 = vld [vmem:[#allocation5 + $0x8] sm:$0xff]
      %v469 = vadd.f32 %v467, 1e-16
      %v470 = vadd.f32 %v468, 1e-16
      %v471 = vrcp.pop %v469
      %v472 = vrcp.pop %v470
      %v473 = vmul.f32 %v469, %v471
      %v474 = vmul.f32 %v470, %v472
      %v475 = vsub.f32 2.0, %v473
      %v476 = vsub.f32 2.0, %v474
      %v477 = vmul.f32 %v471, %v475
      %v478 = vmul.f32 %v472, %v476
      %v479 = vld [vmem:[#allocation6] sm:$0xff]
      %v480 = vld [vmem:[#allocation6 + $0x8] sm:$0xff]
      %482 = vset.pattern.permute.xlu0 0
      %483 = vperm.xlu0 %482, %v477
      %v484 = vpop.permute.xlu0 %483
      %487 = vset.pattern.permute.xlu0 0
      %488 = vperm.xlu0 %487, %v478
      %v489 = vpop.permute.xlu0 %488
      %v491 = vmul.f32 %v479, %v484
      %v492 = vmul.f32 %v480, %v489
      %v493 = vld [vmem:[#allocation3] sm:$0xff]
      %v494 = vld [vmem:[#allocation3 + $0x8] sm:$0xff]
      %v495 = vadd.f32 %v491, %v493
      %v496 = vadd.f32 %v492, %v494
      %vm497 = vcmask 261120
      %498 = vst.msk [vmem:[#allocation10] sm:$0xff] %vm497, %v495
      %499 = vst.msk [vmem:[#allocation10 + $0x8] sm:$0xff] %vm497, %v496
    $region41: #{tpu_custom_call.1} parent=1 // pred_fallthru
      _
    // Predicated region
    $region42: #{tpu_custom_call.1} parent=1 // pred_check
      _
    $region43: #{tpu_custom_call.1} parent=1 // pred_check_branch
      %501 = sbr.rel (0) target = $region45
    $region44: #{tpu_custom_call.1} parent=1 // pred_region
      %503 = vsyncadd [#allocation11], 0
      %s504 = sshll.u32 [#allocation10], 4
      %s505 = int_to_ptr.vmem [resolvable:$true] %s504
      %s506 = sshll.u32 %s9, 4
      %s507 = int_to_ptr.hbm [resolvable:$true] %s506
      %512 = dma.vmem_to_hbm [thread:$0]  %s505, 256, %s507, [#allocation11], 128, 128, 8
    $region45: #{tpu_custom_call.1} parent=1 // pred_fallthru
      _
    // Predicated region
    $region46: #{tpu_custom_call.1} parent=1 // pred_check
      _
    $region47: #{tpu_custom_call.1} parent=1 // pred_check_branch
      %514 = sbr.rel (0) target = $region49
    $region48: #{tpu_custom_call.1} parent=1 // pred_region
      %516 = dma.done [#allocation11], 256
    $region49: #{tpu_custom_call.1} parent=1 // pred_fallthru
      _
    %517 = vsyncpa [#allocation11], 1

</llo_original>
